<compile_context>
chip_gen: v7x
topology: tpu7x:2x2x1
jax: 0.10.0
libtpu: 0.0.40
codegen_flags: <defaults>
</compile_context>

<pallas_src>
import jax
import jax.numpy as jnp
from jax.experimental import pallas as pl
from jax.experimental.pallas import tpu as pltpu


# ------------------------------------------------------------------
# Fused BiLSTM + head kernel
# ------------------------------------------------------------------

def _bilstm_head_kernel(x_ref, wihc_ref, bc_ref, whhb_ref,
                        w1f_ref, w1b_ref, b1_ref, w2_ref, b2_ref,
                        out_ref,
                        xwf_sc, xwb_sc, hf_sc, hb_sc, h2_sc, cf_sc, cb_sc):
    """Fused bidirectional LSTM + (fc -> tanh -> fc_out) head.

    x_ref:    (L, B, E)    time-major embedded input (B padded to sublane mult.)
    wihc_ref: (E, 8H)      concat(W_ih_fwd, W_ih_bwd)
    bc_ref:   (1, 8H)      concat(b_fwd, b_bwd)   (b_ih + b_hh per direction)
    whhb_ref: (2H, 8H)     block-diag [[W_hh_fwd, 0], [0, W_hh_bwd]]
    w1f/w1b:  (H, H)       fc weight split by direction rows
    b1_ref:   (1, H)
    w2_ref:   (H, T), b2_ref: (1, T)
    out_ref:  (L, B, T)    emission (time-major)
    scratches: xw per direction (L,B,4H), per-step hidden outputs (L,B,H) x2,
               recurrent state h2 (B,2H), cells (B,H) x2.
    """
    L, B, E = x_ref.shape
    H = cf_sc.shape[1]
    H4 = 4 * H

    # ---- hoisted input projection: one (L*B, E) x (E, 8H) matmul, bias folded
    x_flat = x_ref[...].reshape(L * B, E)
    xw = (jnp.dot(x_flat, wihc_ref[...], preferred_element_type=jnp.float32)
          + bc_ref[...])                                   # (L*B, 8H)
    xwf_sc[...] = xw[:, :H4].reshape(L, B, H4)
    xwb_sc[...] = xw[:, H4:].reshape(L, B, H4)

    # ---- init recurrent state
    h2_sc[...] = jnp.zeros_like(h2_sc)
    cf_sc[...] = jnp.zeros_like(cf_sc)
    cb_sc[...] = jnp.zeros_like(cb_sc)

    def step(t, carry):
        rt = L - 1 - t
        # single block-diagonal hidden matmul for BOTH directions:
        # (B, 2H) x (2H, 8H) -> (B, 8H)  == [h_f @ Whh_f | h_b @ Whh_b]
        hW = jnp.dot(h2_sc[...], whhb_ref[...],
                     preferred_element_type=jnp.float32)
        gates_f = xwf_sc[t] + hW[:, :H4]                   # (B, 4H)
        gates_b = xwb_sc[rt] + hW[:, H4:]                  # (B, 4H)

        # whole-vreg EUP passes (one sigmoid + one tanh per direction)
        sf = jax.nn.sigmoid(gates_f)
        tf_ = jnp.tanh(gates_f)
        sb = jax.nn.sigmoid(gates_b)
        tb_ = jnp.tanh(gates_b)

        # PyTorch gate order i, f, g, o
        c_f = sf[:, H:2 * H] * cf_sc[...] + sf[:, 0:H] * tf_[:, 2 * H:3 * H]
        h_f = sf[:, 3 * H:4 * H] * jnp.tanh(c_f)
        c_b = sb[:, H:2 * H] * cb_sc[...] + sb[:, 0:H] * tb_[:, 2 * H:3 * H]
        h_b = sb[:, 3 * H:4 * H] * jnp.tanh(c_b)

        cf_sc[...] = c_f
        cb_sc[...] = c_b
        h2_sc[...] = jnp.concatenate([h_f, h_b], axis=1)
        hf_sc[t] = h_f          # forward hidden at real time t
        hb_sc[rt] = h_b         # backward hidden at real time L-1-t
        return carry

    jax.lax.fori_loop(0, L, step, 0)

    # ---- fused head epilogue: fc -> tanh -> fc_out (emission only, no (T,N,T))
    hf = hf_sc[...].reshape(L * B, H)
    hb = hb_sc[...].reshape(L * B, H)
    h1 = jnp.tanh(jnp.dot(hf, w1f_ref[...], preferred_element_type=jnp.float32)
                  + jnp.dot(hb, w1b_ref[...], preferred_element_type=jnp.float32)
                  + b1_ref[...])                           # (L*B, H)
    emission = (jnp.dot(h1, w2_ref[...], preferred_element_type=jnp.float32)
                + b2_ref[...])                             # (L*B, T)
    out_ref[...] = emission.reshape(L, B, out_ref.shape[2])


# ------------------------------------------------------------------
# Forward wrapper (embedding gather + weight packing + CRF broadcast in XLA)
# ------------------------------------------------------------------

def bilstm_crf_forward(text, lengths, params, hidden_dim):
    # lengths is unused in the PyTorch forward (packed = emb); kept for parity.
    del lengths
    B, L = text.shape
    H = hidden_dim
    T = params['transition'].shape[0]
    E = params['embedding'].shape[1]

    # TODO(synk): move the embedding gather in-kernel via scalar-prefetched ids.
    emb = jnp.take(params['embedding'], text, axis=0).astype(jnp.float32)  # (B,L,E)
    x_tm = jnp.transpose(emb, (1, 0, 2))                                   # (L,B,E)

    # pad batch up to a sublane multiple so in-kernel vregs/stores are dense
    Bp = max(8, ((B + 7) // 8) * 8)
    if Bp != B:
        x_tm = jnp.pad(x_tm, ((0, 0), (0, Bp - B), (0, 0)))

    # pack weights once: concat input projections (E, 8H), fold biases,
    # block-diagonal hidden weight (2H, 8H) -> one 256-wide MXU tile per step.
    wih_cat = jnp.concatenate([params['wih_f'], params['wih_b']], axis=1)
    b_cat = jnp.concatenate([params['b_f'], params['b_b']], axis=1)
    zeros = jnp.zeros((H, 4 * H), jnp.float32)
    whh_block = jnp.concatenate(
        [jnp.concatenate([params['whh_f'], zeros], axis=1),
         jnp.concatenate([zeros, params['whh_b']], axis=1)], axis=0)
    w1f = params['w1'][:H]
    w1b = params['w1'][H:]

    emission_tm = pl.pallas_call(
        _bilstm_head_kernel,
        out_shape=jax.ShapeDtypeStruct((L, Bp, T), jnp.float32),
        grid=(1,),
        in_specs=[
            pl.BlockSpec((L, Bp, E), lambda i: (0, 0, 0)),
            pl.BlockSpec(wih_cat.shape, lambda i: (0, 0)),
            pl.BlockSpec(b_cat.shape, lambda i: (0, 0)),
            pl.BlockSpec(whh_block.shape, lambda i: (0, 0)),
            pl.BlockSpec(w1f.shape, lambda i: (0, 0)),
            pl.BlockSpec(w1b.shape, lambda i: (0, 0)),
            pl.BlockSpec(params['b1'].shape, lambda i: (0, 0)),
            pl.BlockSpec(params['w2'].shape, lambda i: (0, 0)),
            pl.BlockSpec(params['b2'].shape, lambda i: (0, 0)),
        ],
        out_specs=pl.BlockSpec((L, Bp, T), lambda i: (0, 0, 0)),
        scratch_shapes=[
            pltpu.VMEM((L, Bp, 4 * H), jnp.float32),   # xw forward
            pltpu.VMEM((L, Bp, 4 * H), jnp.float32),   # xw backward
            pltpu.VMEM((L, Bp, H), jnp.float32),       # forward hiddens
            pltpu.VMEM((L, Bp, H), jnp.float32),       # backward hiddens
            pltpu.VMEM((Bp, 2 * H), jnp.float32),      # [h_f | h_b] state
            pltpu.VMEM((Bp, H), jnp.float32),          # c forward
            pltpu.VMEM((Bp, H), jnp.float32),          # c backward
        ],
        compiler_params=pltpu.CompilerParams(
            dimension_semantics=("arbitrary",)),
    )(x_tm, wih_cat, b_cat, whh_block, w1f, w1b,
      params['b1'], params['w2'], params['b2'])

    emission = jnp.transpose(emission_tm[:, :B, :], (1, 0, 2))      # (B, L, T)
    # CRF score expansion stays in XLA (pure broadcast; avoids T-fold redundant
    # masked stores inside the kernel).
    scores = emission[:, :, None, :] + params['transition'][None, None, :, :]
    return scores


# ------------------------------------------------------------------
# Pure-JAX reference (for correctness check)
# ------------------------------------------------------------------

def reference_forward(text, params, hidden_dim):
    H = hidden_dim
    B, L = text.shape
    emb = jnp.take(params['embedding'], text, axis=0)
    x_tm = jnp.transpose(emb, (1, 0, 2)).astype(jnp.float32)

    def run_dir(x, wih, whh, b):
        def step(carry, x_t):
            h, c = carry
            gates = x_t @ wih + h @ whh + b
            i = jax.nn.sigmoid(gates[:, 0:H])
            f = jax.nn.sigmoid(gates[:, H:2 * H])
            g = jnp.tanh(gates[:, 2 * H:3 * H])
            o = jax.nn.sigmoid(gates[:, 3 * H:4 * H])
            c = f * c + i * g
            h = o * jnp.tanh(c)
            return (h, c), h
        init = (jnp.zeros((B, H), jnp.float32), jnp.zeros((B, H), jnp.float32))
        _, hs = jax.lax.scan(step, init, x)
        return hs

    h_fwd = run_dir(x_tm, params['wih_f'], params['whh_f'], params['b_f'])
    h_bwd = run_dir(x_tm[::-1], params['wih_b'], params['whh_b'], params['b_b'])[::-1]
    rnn_out = jnp.concatenate([h_fwd, h_bwd], axis=-1)
    rnn_out = jnp.transpose(rnn_out, (1, 0, 2))                 # (B, L, 2H)

    h1 = jnp.tanh(rnn_out @ params['w1'] + params['b1'])
    emission = h1 @ params['w2'] + params['b2']                 # (B, L, T)
    scores = emission[:, :, None, :] + params['transition'][None, None, :, :]
    return scores


# ------------------------------------------------------------------
# Deterministic parameter init (shapes from BiLSTM_CRF.__init__)
# ------------------------------------------------------------------

def init_params(key, vocab_size, label_class_size, embed_dim, hidden_dim):
    E, H, T = embed_dim, hidden_dim, label_class_size
    ks = jax.random.split(key, 11)

    def nrm(k, shape, scale=0.1):
        return (scale * jax.random.normal(k, shape)).astype(jnp.float32)

    return {
        'embedding': nrm(ks[0], (vocab_size, E)),
        # LSTM, forward direction (transposed torch layout: (in, 4H))
        'wih_f': nrm(ks[1], (E, 4 * H)),
        'whh_f': nrm(ks[2], (H, 4 * H)),
        'b_f': nrm(ks[3], (1, 4 * H)),          # b_ih + b_hh combined
        # LSTM, backward direction
        'wih_b': nrm(ks[4], (E, 4 * H)),
        'whh_b': nrm(ks[5], (H, 4 * H)),
        'b_b': nrm(ks[6], (1, 4 * H)),
        # fc: Linear(2H -> H), fc_out: Linear(H -> T)   (stored transposed)
        'w1': nrm(ks[7], (2 * H, H)),
        'b1': nrm(ks[8], (1, H)),
        'w2': nrm(ks[9], (H, T)),
        'b2': nrm(ks[10], (1, T)),
        # transition initialized exactly like the module: ones * 1/T
        'transition': jnp.full((T, T), 1.0 / T, dtype=jnp.float32),
    }


# ------------------------------------------------------------------

if __name__ == "__main__":
    vocab_size = 50
    label_class_size = 8
    embed_dim = 16
    hidden_dim = 32
    B, L = 2, 8

    key = jax.random.PRNGKey(0)
    k_text, k_param = jax.random.split(key)
    text = jax.random.randint(k_text, (B, L), 0, vocab_size, dtype=jnp.int32)
    lengths = jnp.array([L, L - 2], dtype=jnp.int32)   # unused by forward (parity)
    params = init_params(k_param, vocab_size, label_class_size, embed_dim, hidden_dim)

    scores = bilstm_crf_forward(text, lengths, params, hidden_dim)
    scores = jax.block_until_ready(scores)
    assert scores.shape == (B, L, label_class_size, label_class_size)
    assert scores.dtype == jnp.float32

    ref = reference_forward(text, params, hidden_dim)
    if not jnp.allclose(scores, ref, atol=1e-2, rtol=1e-2):
        raise AssertionError("Pallas kernel output mismatches JAX reference")

    print("KERNEL_OK")
</pallas_src>

<mosaic_0001>
module attributes {stable_mosaic.version = 11 : i64} {
  func.func @_bilstm_head_kernel(%arg0: i32, %arg1: memref<8x8x16xf32, #tpu.memory_space<vmem>>, %arg2: memref<16x256xf32, #tpu.memory_space<vmem>>, %arg3: memref<1x256xf32, #tpu.memory_space<vmem>>, %arg4: memref<64x256xf32, #tpu.memory_space<vmem>>, %arg5: memref<32x32xf32, #tpu.memory_space<vmem>>, %arg6: memref<32x32xf32, #tpu.memory_space<vmem>>, %arg7: memref<1x32xf32, #tpu.memory_space<vmem>>, %arg8: memref<32x8xf32, #tpu.memory_space<vmem>>, %arg9: memref<1x8xf32, #tpu.memory_space<vmem>>, %arg10: memref<8x8x8xf32, #tpu.memory_space<vmem>>, %arg11: memref<8x8x128xf32, #tpu.memory_space<vmem>>, %arg12: memref<8x8x128xf32, #tpu.memory_space<vmem>>, %arg13: memref<8x8x32xf32, #tpu.memory_space<vmem>>, %arg14: memref<8x8x32xf32, #tpu.memory_space<vmem>>, %arg15: memref<8x64xf32, #tpu.memory_space<vmem>>, %arg16: memref<8x32xf32, #tpu.memory_space<vmem>>, %arg17: memref<8x32xf32, #tpu.memory_space<vmem>>) attributes {dimension_semantics = [#tpu.dimension_semantics<arbitrary>], iteration_bounds = array<i64: 1>, scalar_prefetch = 0 : i64, scratch_operands = 7 : i64, tpu.core_type = #tpu.core_type<tc>, window_params = [{pipeline_mode = #tpu.pipeline_mode<synchronous>, transform_indices = @transform_0, window_bounds = array<i64: 8, 8, 16>}, {pipeline_mode = #tpu.pipeline_mode<synchronous>, transform_indices = @transform_1, window_bounds = array<i64: 16, 256>}, {pipeline_mode = #tpu.pipeline_mode<synchronous>, transform_indices = @transform_2, window_bounds = array<i64: 1, 256>}, {pipeline_mode = #tpu.pipeline_mode<synchronous>, transform_indices = @transform_3, window_bounds = array<i64: 64, 256>}, {pipeline_mode = #tpu.pipeline_mode<synchronous>, transform_indices = @transform_4, window_bounds = array<i64: 32, 32>}, {pipeline_mode = #tpu.pipeline_mode<synchronous>, transform_indices = @transform_5, window_bounds = array<i64: 32, 32>}, {pipeline_mode = #tpu.pipeline_mode<synchronous>, transform_indices = @transform_6, window_bounds = array<i64: 1, 32>}, {pipeline_mode = #tpu.pipeline_mode<synchronous>, transform_indices = @transform_7, window_bounds = array<i64: 32, 8>}, {pipeline_mode = #tpu.pipeline_mode<synchronous>, transform_indices = @transform_8, window_bounds = array<i64: 1, 8>}, {pipeline_mode = #tpu.pipeline_mode<synchronous>, transform_indices = @transform_9, window_bounds = array<i64: 8, 8, 8>}]} {
    %c0 = arith.constant 0 : index
    %c0_0 = arith.constant 0 : index
    %c0_1 = arith.constant 0 : index
    %0 = vector.load %arg1[%c0, %c0_0, %c0_1] : memref<8x8x16xf32, #tpu.memory_space<vmem>>, vector<8x8x16xf32>
    %1 = vector.shape_cast %0 : vector<8x8x16xf32> to vector<64x16xf32>
    %c0_2 = arith.constant 0 : index
    %c0_3 = arith.constant 0 : index
    %2 = vector.load %arg2[%c0_2, %c0_3] : memref<16x256xf32, #tpu.memory_space<vmem>>, vector<16x256xf32>
    %cst = arith.constant dense<0.000000e+00> : vector<64x256xf32>
    %3 = tpu.matmul %1, %2, %cst {dimension_numbers = #tpu.dot_dimension_numbers<[1], [0], [0], [1], [0, 0, 1, 1], [], []>} : vector<64x16xf32>, vector<16x256xf32>, vector<64x256xf32> -> vector<64x256xf32>
    %c0_4 = arith.constant 0 : index
    %c0_5 = arith.constant 0 : index
    %4 = vector.load %arg3[%c0_4, %c0_5] : memref<1x256xf32, #tpu.memory_space<vmem>>, vector<1x256xf32>
    %5 = vector.broadcast %4 : vector<1x256xf32> to vector<64x256xf32>
    %6 = arith.addf %3, %5 : vector<64x256xf32>
    %7 = vector.extract_strided_slice %6 {offsets = [0, 0], sizes = [64, 128], strides = [1, 1]} : vector<64x256xf32> to vector<64x128xf32>
    %8 = vector.shape_cast %7 : vector<64x128xf32> to vector<8x8x128xf32>
    %c0_6 = arith.constant 0 : index
    %c0_7 = arith.constant 0 : index
    %c0_8 = arith.constant 0 : index
    %9 = vector.load %arg11[%c0_6, %c0_7, %c0_8] : memref<8x8x128xf32, #tpu.memory_space<vmem>>, vector<8x8x128xf32>
    tpu.vector_store %arg11[%c0_6, %c0_7, %c0_8], %8 {strides = array<i32>} : memref<8x8x128xf32, #tpu.memory_space<vmem>>, vector<8x8x128xf32>,
    %10 = vector.extract_strided_slice %6 {offsets = [0, 128], sizes = [64, 128], strides = [1, 1]} : vector<64x256xf32> to vector<64x128xf32>
    %11 = vector.shape_cast %10 : vector<64x128xf32> to vector<8x8x128xf32>
    %c0_9 = arith.constant 0 : index
    %c0_10 = arith.constant 0 : index
    %c0_11 = arith.constant 0 : index
    %12 = vector.load %arg12[%c0_9, %c0_10, %c0_11] : memref<8x8x128xf32, #tpu.memory_space<vmem>>, vector<8x8x128xf32>
    tpu.vector_store %arg12[%c0_9, %c0_10, %c0_11], %11 {strides = array<i32>} : memref<8x8x128xf32, #tpu.memory_space<vmem>>, vector<8x8x128xf32>,
    %cst_12 = arith.constant 0.000000e+00 : f32
    %13 = vector.broadcast %cst_12 : f32 to vector<8x64xf32>
    %c0_13 = arith.constant 0 : index
    %c0_14 = arith.constant 0 : index
    %14 = vector.load %arg15[%c0_13, %c0_14] : memref<8x64xf32, #tpu.memory_space<vmem>>, vector<8x64xf32>
    tpu.vector_store %arg15[%c0_13, %c0_14], %13 {strides = array<i32>} : memref<8x64xf32, #tpu.memory_space<vmem>>, vector<8x64xf32>,
    %cst_15 = arith.constant 0.000000e+00 : f32
    %15 = vector.broadcast %cst_15 : f32 to vector<8x32xf32>
    %c0_16 = arith.constant 0 : index
    %c0_17 = arith.constant 0 : index
    %16 = vector.load %arg16[%c0_16, %c0_17] : memref<8x32xf32, #tpu.memory_space<vmem>>, vector<8x32xf32>
    tpu.vector_store %arg16[%c0_16, %c0_17], %15 {strides = array<i32>} : memref<8x32xf32, #tpu.memory_space<vmem>>, vector<8x32xf32>,
    %cst_18 = arith.constant 0.000000e+00 : f32
    %17 = vector.broadcast %cst_18 : f32 to vector<8x32xf32>
    %c0_19 = arith.constant 0 : index
    %c0_20 = arith.constant 0 : index
    %18 = vector.load %arg17[%c0_19, %c0_20] : memref<8x32xf32, #tpu.memory_space<vmem>>, vector<8x32xf32>
    tpu.vector_store %arg17[%c0_19, %c0_20], %17 {strides = array<i32>} : memref<8x32xf32, #tpu.memory_space<vmem>>, vector<8x32xf32>,
    %c0_i32 = arith.constant 0 : i32
    %c8_i32 = arith.constant 8 : i32
    %19 = arith.addi %c0_i32, %c8_i32 : i32
    %c1_i32 = arith.constant 1 : i32
    scf.for %arg18 = %c0_i32 to %19 step %c1_i32  : i32 {
      %c7_i32 = arith.constant 7 : i32
      %40 = arith.subi %c7_i32, %arg18 : i32
      %c0_44 = arith.constant 0 : index
      %c0_45 = arith.constant 0 : index
      %41 = vector.load %arg15[%c0_44, %c0_45] : memref<8x64xf32, #tpu.memory_space<vmem>>, vector<8x64xf32>
      %c0_46 = arith.constant 0 : index
      %c0_47 = arith.constant 0 : index
      %42 = vector.load %arg4[%c0_46, %c0_47] : memref<64x256xf32, #tpu.memory_space<vmem>>, vector<64x256xf32>
      %cst_48 = arith.constant dense<0.000000e+00> : vector<8x256xf32>
      %43 = tpu.matmul %41, %42, %cst_48 {dimension_numbers = #tpu.dot_dimension_numbers<[1], [0], [0], [1], [0, 0, 1, 1], [], []>} : vector<8x64xf32>, vector<64x256xf32>, vector<8x256xf32> -> vector<8x256xf32>
      %44 = arith.index_cast %arg18 : i32 to index
      %c0_49 = arith.constant 0 : index
      %c0_50 = arith.constant 0 : index
      %45 = vector.load %arg11[%44, %c0_49, %c0_50] : memref<8x8x128xf32, #tpu.memory_space<vmem>>, vector<1x8x128xf32>
      %46 = vector.shape_cast %45 : vector<1x8x128xf32> to vector<8x128xf32>
      %47 = vector.extract_strided_slice %43 {offsets = [0, 0], sizes = [8, 128], strides = [1, 1]} : vector<8x256xf32> to vector<8x128xf32>
      %48 = arith.addf %46, %47 : vector<8x128xf32>
      %49 = arith.index_cast %40 : i32 to index
      %c0_51 = arith.constant 0 : index
      %c0_52 = arith.constant 0 : index
      %50 = vector.load %arg12[%49, %c0_51, %c0_52] : memref<8x8x128xf32, #tpu.memory_space<vmem>>, vector<1x8x128xf32>
      %51 = vector.shape_cast %50 : vector<1x8x128xf32> to vector<8x128xf32>
      %52 = vector.extract_strided_slice %43 {offsets = [0, 128], sizes = [8, 128], strides = [1, 1]} : vector<8x256xf32> to vector<8x128xf32>
      %53 = arith.addf %51, %52 : vector<8x128xf32>
      %54 = arith.negf %48 : vector<8x128xf32>
      %55 = math.exp %54 : vector<8x128xf32>
      %cst_53 = arith.constant 1.000000e+00 : f32
      %56 = vector.broadcast %cst_53 : f32 to vector<8x128xf32>
      %57 = arith.addf %56, %55 : vector<8x128xf32>
      %58 = arith.divf %56, %57 : vector<8x128xf32>
      %59 = math.tanh %48 : vector<8x128xf32>
      %60 = arith.negf %53 : vector<8x128xf32>
      %61 = math.exp %60 : vector<8x128xf32>
      %cst_54 = arith.constant 1.000000e+00 : f32
      %62 = vector.broadcast %cst_54 : f32 to vector<8x128xf32>
      %63 = arith.addf %62, %61 : vector<8x128xf32>
      %64 = arith.divf %62, %63 : vector<8x128xf32>
      %65 = math.tanh %53 : vector<8x128xf32>
      %66 = vector.extract_strided_slice %58 {offsets = [0, 32], sizes = [8, 32], strides = [1, 1]} : vector<8x128xf32> to vector<8x32xf32>
      %c0_55 = arith.constant 0 : index
      %c0_56 = arith.constant 0 : index
      %67 = vector.load %arg16[%c0_55, %c0_56] : memref<8x32xf32, #tpu.memory_space<vmem>>, vector<8x32xf32>
      %68 = arith.mulf %66, %67 : vector<8x32xf32>
      %69 = vector.extract_strided_slice %58 {offsets = [0, 0], sizes = [8, 32], strides = [1, 1]} : vector<8x128xf32> to vector<8x32xf32>
      %70 = vector.extract_strided_slice %59 {offsets = [0, 64], sizes = [8, 32], strides = [1, 1]} : vector<8x128xf32> to vector<8x32xf32>
      %71 = arith.mulf %69, %70 : vector<8x32xf32>
      %72 = arith.addf %68, %71 : vector<8x32xf32>
      %73 = vector.extract_strided_slice %58 {offsets = [0, 96], sizes = [8, 32], strides = [1, 1]} : vector<8x128xf32> to vector<8x32xf32>
      %74 = math.tanh %72 : vector<8x32xf32>
      %75 = arith.mulf %73, %74 : vector<8x32xf32>
      %76 = vector.extract_strided_slice %64 {offsets = [0, 32], sizes = [8, 32], strides = [1, 1]} : vector<8x128xf32> to vector<8x32xf32>
      %c0_57 = arith.constant 0 : index
      %c0_58 = arith.constant 0 : index
      %77 = vector.load %arg17[%c0_57, %c0_58] : memref<8x32xf32, #tpu.memory_space<vmem>>, vector<8x32xf32>
      %78 = arith.mulf %76, %77 : vector<8x32xf32>
      %79 = vector.extract_strided_slice %64 {offsets = [0, 0], sizes = [8, 32], strides = [1, 1]} : vector<8x128xf32> to vector<8x32xf32>
      %80 = vector.extract_strided_slice %65 {offsets = [0, 64], sizes = [8, 32], strides = [1, 1]} : vector<8x128xf32> to vector<8x32xf32>
      %81 = arith.mulf %79, %80 : vector<8x32xf32>
      %82 = arith.addf %78, %81 : vector<8x32xf32>
      %83 = vector.extract_strided_slice %64 {offsets = [0, 96], sizes = [8, 32], strides = [1, 1]} : vector<8x128xf32> to vector<8x32xf32>
      %84 = math.tanh %82 : vector<8x32xf32>
      %85 = arith.mulf %83, %84 : vector<8x32xf32>
      %c0_59 = arith.constant 0 : index
      %c0_60 = arith.constant 0 : index
      %86 = vector.load %arg16[%c0_59, %c0_60] : memref<8x32xf32, #tpu.memory_space<vmem>>, vector<8x32xf32>
      tpu.vector_store %arg16[%c0_59, %c0_60], %72 {strides = array<i32>} : memref<8x32xf32, #tpu.memory_space<vmem>>, vector<8x32xf32>,
      %c0_61 = arith.constant 0 : index
      %c0_62 = arith.constant 0 : index
      %87 = vector.load %arg17[%c0_61, %c0_62] : memref<8x32xf32, #tpu.memory_space<vmem>>, vector<8x32xf32>
      tpu.vector_store %arg17[%c0_61, %c0_62], %82 {strides = array<i32>} : memref<8x32xf32, #tpu.memory_space<vmem>>, vector<8x32xf32>,
      %88 = tpu.concatenate %75, %85 in 1 : vector<8x32xf32>, vector<8x32xf32> -> vector<8x64xf32>
      %c0_63 = arith.constant 0 : index
      %c0_64 = arith.constant 0 : index
      %89 = vector.load %arg15[%c0_63, %c0_64] : memref<8x64xf32, #tpu.memory_space<vmem>>, vector<8x64xf32>
      tpu.vector_store %arg15[%c0_63, %c0_64], %88 {strides = array<i32>} : memref<8x64xf32, #tpu.memory_space<vmem>>, vector<8x64xf32>,
      %90 = arith.index_cast %arg18 : i32 to index
      %c0_65 = arith.constant 0 : index
      %c0_66 = arith.constant 0 : index
      %91 = vector.load %arg13[%90, %c0_65, %c0_66] : memref<8x8x32xf32, #tpu.memory_space<vmem>>, vector<1x8x32xf32>
      %92 = vector.shape_cast %91 : vector<1x8x32xf32> to vector<8x32xf32>
      %93 = vector.shape_cast %75 : vector<8x32xf32> to vector<1x8x32xf32>
      tpu.vector_store %arg13[%90, %c0_65, %c0_66], %93 {strides = array<i32>} : memref<8x8x32xf32, #tpu.memory_space<vmem>>, vector<1x8x32xf32>,
      %94 = arith.index_cast %40 : i32 to index
      %c0_67 = arith.constant 0 : index
      %c0_68 = arith.constant 0 : index
      %95 = vector.load %arg14[%94, %c0_67, %c0_68] : memref<8x8x32xf32, #tpu.memory_space<vmem>>, vector<1x8x32xf32>
      %96 = vector.shape_cast %95 : vector<1x8x32xf32> to vector<8x32xf32>
      %97 = vector.shape_cast %85 : vector<8x32xf32> to vector<1x8x32xf32>
      tpu.vector_store %arg14[%94, %c0_67, %c0_68], %97 {strides = array<i32>} : memref<8x8x32xf32, #tpu.memory_space<vmem>>, vector<1x8x32xf32>,
    }
    %c8_i32_21 = arith.constant 8 : i32
    %c0_22 = arith.constant 0 : index
    %c0_23 = arith.constant 0 : index
    %c0_24 = arith.constant 0 : index
    %20 = vector.load %arg13[%c0_22, %c0_23, %c0_24] : memref<8x8x32xf32, #tpu.memory_space<vmem>>, vector<8x8x32xf32>
    %21 = vector.shape_cast %20 : vector<8x8x32xf32> to vector<64x32xf32>
    %c0_25 = arith.constant 0 : index
    %c0_26 = arith.constant 0 : index
    %c0_27 = arith.constant 0 : index
    %22 = vector.load %arg14[%c0_25, %c0_26, %c0_27] : memref<8x8x32xf32, #tpu.memory_space<vmem>>, vector<8x8x32xf32>
    %23 = vector.shape_cast %22 : vector<8x8x32xf32> to vector<64x32xf32>
    %c0_28 = arith.constant 0 : index
    %c0_29 = arith.constant 0 : index
    %24 = vector.load %arg5[%c0_28, %c0_29] : memref<32x32xf32, #tpu.memory_space<vmem>>, vector<32x32xf32>
    %cst_30 = arith.constant dense<0.000000e+00> : vector<64x32xf32>
    %25 = tpu.matmul %21, %24, %cst_30 {dimension_numbers = #tpu.dot_dimension_numbers<[1], [0], [0], [1], [0, 0, 1, 1], [], []>} : vector<64x32xf32>, vector<32x32xf32>, vector<64x32xf32> -> vector<64x32xf32>
    %c0_31 = arith.constant 0 : index
    %c0_32 = arith.constant 0 : index
    %26 = vector.load %arg6[%c0_31, %c0_32] : memref<32x32xf32, #tpu.memory_space<vmem>>, vector<32x32xf32>
    %cst_33 = arith.constant dense<0.000000e+00> : vector<64x32xf32>
    %27 = tpu.matmul %23, %26, %cst_33 {dimension_numbers = #tpu.dot_dimension_numbers<[1], [0], [0], [1], [0, 0, 1, 1], [], []>} : vector<64x32xf32>, vector<32x32xf32>, vector<64x32xf32> -> vector<64x32xf32>
    %28 = arith.addf %25, %27 : vector<64x32xf32>
    %c0_34 = arith.constant 0 : index
    %c0_35 = arith.constant 0 : index
    %29 = vector.load %arg7[%c0_34, %c0_35] : memref<1x32xf32, #tpu.memory_space<vmem>>, vector<1x32xf32>
    %30 = vector.broadcast %29 : vector<1x32xf32> to vector<64x32xf32>
    %31 = arith.addf %28, %30 : vector<64x32xf32>
    %32 = math.tanh %31 : vector<64x32xf32>
    %c0_36 = arith.constant 0 : index
    %c0_37 = arith.constant 0 : index
    %33 = vector.load %arg8[%c0_36, %c0_37] : memref<32x8xf32, #tpu.memory_space<vmem>>, vector<32x8xf32>
    %cst_38 = arith.constant dense<0.000000e+00> : vector<64x8xf32>
    %34 = tpu.matmul %32, %33, %cst_38 {dimension_numbers = #tpu.dot_dimension_numbers<[1], [0], [0], [1], [0, 0, 1, 1], [], []>} : vector<64x32xf32>, vector<32x8xf32>, vector<64x8xf32> -> vector<64x8xf32>
    %c0_39 = arith.constant 0 : index
    %c0_40 = arith.constant 0 : index
    %35 = vector.load %arg9[%c0_39, %c0_40] : memref<1x8xf32, #tpu.memory_space<vmem>>, vector<1x8xf32>
    %36 = vector.broadcast %35 : vector<1x8xf32> to vector<64x8xf32>
    %37 = arith.addf %34, %36 : vector<64x8xf32>
    %38 = vector.shape_cast %37 : vector<64x8xf32> to vector<8x8x8xf32>
    %c0_41 = arith.constant 0 : index
    %c0_42 = arith.constant 0 : index
    %c0_43 = arith.constant 0 : index
    %39 = vector.load %arg10[%c0_41, %c0_42, %c0_43] : memref<8x8x8xf32, #tpu.memory_space<vmem>>, vector<8x8x8xf32>
    tpu.vector_store %arg10[%c0_41, %c0_42, %c0_43], %38 {strides = array<i32>} : memref<8x8x8xf32, #tpu.memory_space<vmem>>, vector<8x8x8xf32>,
    return
  }
  func.func @transform_0(%arg0: i32) -> (i32, i32, i32) {
    %c0_i32 = arith.constant 0 : i32
    %c0_i32_0 = arith.constant 0 : i32
    %c0_i32_1 = arith.constant 0 : i32
    %c0_i32_2 = arith.constant 0 : i32
    return %c0_i32, %c0_i32_0, %c0_i32_1 : i32, i32, i32
  }
  func.func @transform_1(%arg0: i32) -> (i32, i32) {
    %c0_i32 = arith.constant 0 : i32
    %c0_i32_0 = arith.constant 0 : i32
    %c0_i32_1 = arith.constant 0 : i32
    return %c0_i32, %c0_i32_0 : i32, i32
  }
  func.func @transform_2(%arg0: i32) -> (i32, i32) {
    %c0_i32 = arith.constant 0 : i32
    %c0_i32_0 = arith.constant 0 : i32
    %c0_i32_1 = arith.constant 0 : i32
    return %c0_i32, %c0_i32_0 : i32, i32
  }
  func.func @transform_3(%arg0: i32) -> (i32, i32) {
    %c0_i32 = arith.constant 0 : i32
    %c0_i32_0 = arith.constant 0 : i32
    %c0_i32_1 = arith.constant 0 : i32
    return %c0_i32, %c0_i32_0 : i32, i32
  }
  func.func @transform_4(%arg0: i32) -> (i32, i32) {
    %c0_i32 = arith.constant 0 : i32
    %c0_i32_0 = arith.constant 0 : i32
    %c0_i32_1 = arith.constant 0 : i32
    return %c0_i32, %c0_i32_0 : i32, i32
  }
  func.func @transform_5(%arg0: i32) -> (i32, i32) {
    %c0_i32 = arith.constant 0 : i32
    %c0_i32_0 = arith.constant 0 : i32
    %c0_i32_1 = arith.constant 0 : i32
    return %c0_i32, %c0_i32_0 : i32, i32
  }
  func.func @transform_6(%arg0: i32) -> (i32, i32) {
    %c0_i32 = arith.constant 0 : i32
    %c0_i32_0 = arith.constant 0 : i32
    %c0_i32_1 = arith.constant 0 : i32
    return %c0_i32, %c0_i32_0 : i32, i32
  }
  func.func @transform_7(%arg0: i32) -> (i32, i32) {
    %c0_i32 = arith.constant 0 : i32
    %c0_i32_0 = arith.constant 0 : i32
    %c0_i32_1 = arith.constant 0 : i32
    return %c0_i32, %c0_i32_0 : i32, i32
  }
  func.func @transform_8(%arg0: i32) -> (i32, i32) {
    %c0_i32 = arith.constant 0 : i32
    %c0_i32_0 = arith.constant 0 : i32
    %c0_i32_1 = arith.constant 0 : i32
    return %c0_i32, %c0_i32_0 : i32, i32
  }
  func.func @transform_9(%arg0: i32) -> (i32, i32, i32) {
    %c0_i32 = arith.constant 0 : i32
    %c0_i32_0 = arith.constant 0 : i32
    %c0_i32_1 = arith.constant 0 : i32
    %c0_i32_2 = arith.constant 0 : i32
    return %c0_i32, %c0_i32_0, %c0_i32_1 : i32, i32, i32
  }
}

</mosaic_0001>

<llo_original>
// kernel: tpu_custom_call.1
$region0: #{tpu_custom_call.1}
  #allocation0 [shape = 'u32[]', space=smem, size = 0x4, offset = 0x4, fixed_abs, tag = 'smem constant byte address 0x4 - core index']
  #allocation1 [shape = 'u32[144,128]{1,0:T(1,128)}', space=vmem, size = 0x12000, scoped, tag = 'internal scratch']
  #allocation2 [shape = 'f32[8,8,128]{2,1,0:T(8,128)}', space=vmem, size = 0x8000, scoped, tag = 'scratch operand']
  #allocation3 [shape = 'f32[8,8,128]{2,1,0:T(8,128)}', space=vmem, size = 0x8000, scoped, tag = 'scratch operand']
  #allocation4 [shape = 'f32[8,8,32]{2,1,0:T(8,128)}', space=vmem, size = 0x8000, scoped, tag = 'scratch operand']
  #allocation5 [shape = 'f32[8,8,32]{2,1,0:T(8,128)}', space=vmem, size = 0x8000, scoped, tag = 'scratch operand']
  #allocation6 [shape = 'f32[8,64]{1,0:T(8,128)}', space=vmem, size = 0x1000, scoped, tag = 'scratch operand']
  #allocation7 [shape = 'f32[8,32]{1,0:T(8,128)}', space=vmem, size = 0x1000, scoped, tag = 'scratch operand']
  #allocation8 [shape = 'f32[8,32]{1,0:T(8,128)}', space=vmem, size = 0x1000, scoped, tag = 'scratch operand']
  %s0 = inlined_call_operand.hbm [shape: f32[8,8,16], index: 0, kind: input, shape index: {}]
  %s1 = inlined_call_operand.vmem [shape: f32[16,256], index: 1, kind: input, shape index: {}]
  %s2 = inlined_call_operand.vmem [shape: f32[1,256], index: 2, kind: input, shape index: {}]
  %s3 = inlined_call_operand.hbm [shape: f32[64,256], index: 3, kind: input, shape index: {}]
  %s4 = inlined_call_operand.hbm [shape: f32[32,32], index: 4, kind: input, shape index: {}]
  %s5 = inlined_call_operand.hbm [shape: f32[32,32], index: 5, kind: input, shape index: {}]
  %s6 = inlined_call_operand.vmem [shape: f32[1,32], index: 6, kind: input, shape index: {}]
  %s7 = inlined_call_operand.vmem [shape: f32[32,8], index: 7, kind: input, shape index: {}]
  %s8 = inlined_call_operand.vmem [shape: f32[1,8], index: 8, kind: input, shape index: {}]
  %s9 = inlined_call_operand.hbm [shape: f32[8,8,8], index: 9, kind: output, shape index: {}]
  %s10 = sld [smem:[#allocation0]]
  $region69: #{tpu_custom_call.1} parent=0
    _
  %s12 = ssub.s32 1, %s10
  %s13 = scalar_select 0, %s12, %s10
  $region1: #{tpu_custom_call.1} parent=0
    #allocation9 [shape = 'u8[32768]{0}', space=vmem, size = 0x8000, scoped, tag = 'input window, operand 0, single buffered']
    #allocation10 [shape = 's32[1]{0}', space=sflag, size = 0x4, scoped, tag = 'scoped memory for tpu_custom_call.1']
    #allocation11 [shape = 's32[1]{0}', space=sflag, size = 0x4, scoped, tag = 'scoped memory for tpu_custom_call.1']
    #allocation12 [shape = 'u8[65536]{0}', space=vmem, size = 0x10000, scoped, tag = 'input window, operand 3, single buffered']
    #allocation13 [shape = 's32[1]{0}', space=sflag, size = 0x4, scoped, tag = 'scoped memory for tpu_custom_call.1']
    #allocation14 [shape = 'u8[16384]{0}', space=vmem, size = 0x4000, scoped, tag = 'input window, operand 4, single buffered']
    #allocation15 [shape = 'u8[16384]{0}', space=vmem, size = 0x4000, scoped, tag = 'input window, operand 5, single buffered']
    #allocation16 [shape = 's32[1]{0}', space=sflag, size = 0x4, scoped, tag = 'scoped memory for tpu_custom_call.1']
    #allocation17 [shape = 'u8[32768]{0}', space=vmem, size = 0x8000, scoped, tag = 'output window, operand 0, single buffered']
    %14 = vsyncpa [#allocation10], 0
    %15 = vsyncpa [#allocation13], 0
    %16 = vsyncpa [#allocation16], 0
    %17 = vsyncpa [#allocation11], 0
    // Predicated region
    $region2: #{tpu_custom_call.1} parent=1 // pred_check
      _
    $region3: #{tpu_custom_call.1} parent=1 // pred_check_branch
      %19 = sbr.rel (0) target = $region5
    $region4: #{tpu_custom_call.1} parent=1 // pred_region
      %s21 = ssub.s32 1024, 1024
      %22 = vsyncadd [#allocation10], %s21
      %s23 = sshll.u32 [#allocation9], 4
      %s24 = int_to_ptr.vmem [resolvable:$true] %s23
      %29 = dma.hbm_to_vmem [thread:$0]  %s0, 1024, %s24, [#allocation10], 128, 128, 8
    $region5: #{tpu_custom_call.1} parent=1 // pred_fallthru
      _
    // Predicated region
    $region6: #{tpu_custom_call.1} parent=1 // pred_check
      _
    $region7: #{tpu_custom_call.1} parent=1 // pred_check_branch
      %31 = sbr.rel (0) target = $region9
    $region8: #{tpu_custom_call.1} parent=1 // pred_region
      _
    $region9: #{tpu_custom_call.1} parent=1 // pred_fallthru
      _
    // Predicated region
    $region10: #{tpu_custom_call.1} parent=1 // pred_check
      _
    $region11: #{tpu_custom_call.1} parent=1 // pred_check_branch
      %33 = sbr.rel (0) target = $region13
    $region12: #{tpu_custom_call.1} parent=1 // pred_region
      _
    $region13: #{tpu_custom_call.1} parent=1 // pred_fallthru
      _
    // Predicated region
    $region14: #{tpu_custom_call.1} parent=1 // pred_check
      _
    $region15: #{tpu_custom_call.1} parent=1 // pred_check_branch
      %35 = sbr.rel (0) target = $region17
    $region16: #{tpu_custom_call.1} parent=1 // pred_region
      %s37 = ssub.s32 2048, 2048
      %38 = vsyncadd [#allocation13], %s37
      %s39 = sshll.u32 [#allocation12], 4
      %s40 = int_to_ptr.vmem [resolvable:$true] %s39
      %45 = dma.hbm_to_vmem [thread:$0]  %s3, 2048, %s40, [#allocation13], 256, 256, 16
    $region17: #{tpu_custom_call.1} parent=1 // pred_fallthru
      _
    // Predicated region
    $region18: #{tpu_custom_call.1} parent=1 // pred_check
      _
    $region19: #{tpu_custom_call.1} parent=1 // pred_check_branch
      %47 = sbr.rel (0) target = $region21
    $region20: #{tpu_custom_call.1} parent=1 // pred_region
      %s49 = ssub.s32 512, 512
      %50 = vsyncadd [#allocation13], %s49
      %s51 = sshll.u32 [#allocation14], 4
      %s52 = int_to_ptr.vmem [resolvable:$true] %s51
      %57 = dma.hbm_to_vmem [thread:$0]  %s4, 512, %s52, [#allocation13], 128, 128, 8
    $region21: #{tpu_custom_call.1} parent=1 // pred_fallthru
      _
    // Predicated region
    $region22: #{tpu_custom_call.1} parent=1 // pred_check
      _
    $region23: #{tpu_custom_call.1} parent=1 // pred_check_branch
      %59 = sbr.rel (0) target = $region25
    $region24: #{tpu_custom_call.1} parent=1 // pred_region
      %s61 = ssub.s32 512, 512
      %62 = vsyncadd [#allocation16], %s61
      %s63 = sshll.u32 [#allocation15], 4
      %s64 = int_to_ptr.vmem [resolvable:$true] %s63
      %69 = dma.hbm_to_vmem [thread:$0]  %s5, 512, %s64, [#allocation16], 128, 128, 8
    $region25: #{tpu_custom_call.1} parent=1 // pred_fallthru
      _
    // Predicated region
    $region26: #{tpu_custom_call.1} parent=1 // pred_check
      _
    $region27: #{tpu_custom_call.1} parent=1 // pred_check_branch
      %71 = sbr.rel (0) target = $region29
    $region28: #{tpu_custom_call.1} parent=1 // pred_region
      _
    $region29: #{tpu_custom_call.1} parent=1 // pred_fallthru
      _
    // Predicated region
    $region30: #{tpu_custom_call.1} parent=1 // pred_check
      _
    $region31: #{tpu_custom_call.1} parent=1 // pred_check_branch
      %73 = sbr.rel (0) target = $region33
    $region32: #{tpu_custom_call.1} parent=1 // pred_region
      _
    $region33: #{tpu_custom_call.1} parent=1 // pred_fallthru
      _
    // Predicated region
    $region34: #{tpu_custom_call.1} parent=1 // pred_check
      _
    $region35: #{tpu_custom_call.1} parent=1 // pred_check_branch
      %75 = sbr.rel (0) target = $region37
    $region36: #{tpu_custom_call.1} parent=1 // pred_region
      _
    $region37: #{tpu_custom_call.1} parent=1 // pred_fallthru
      _
    // Predicated region
    $region38: #{tpu_custom_call.1} parent=1 // pred_check
      _
    $region39: #{tpu_custom_call.1} parent=1 // pred_check_branch
      %77 = sbr.rel (0) target = $region41
    $region40: #{tpu_custom_call.1} parent=1 // pred_region
      %78 = dma.done [#allocation10], 1024
    $region41: #{tpu_custom_call.1} parent=1 // pred_fallthru
      _
    // Predicated region
    $region42: #{tpu_custom_call.1} parent=1 // pred_check
      _
    $region43: #{tpu_custom_call.1} parent=1 // pred_check_branch
      %80 = sbr.rel (0) target = $region45
    $region44: #{tpu_custom_call.1} parent=1 // pred_region
      %81 = dma.done [#allocation13], 2048
    $region45: #{tpu_custom_call.1} parent=1 // pred_fallthru
      _
    // Predicated region
    $region46: #{tpu_custom_call.1} parent=1 // pred_check
      _
    $region47: #{tpu_custom_call.1} parent=1 // pred_check_branch
      %83 = sbr.rel (0) target = $region49
    $region48: #{tpu_custom_call.1} parent=1 // pred_region
      %84 = dma.done [#allocation13], 512
    $region49: #{tpu_custom_call.1} parent=1 // pred_fallthru
      _
    // Predicated region
    $region50: #{tpu_custom_call.1} parent=1 // pred_check
      _
    $region51: #{tpu_custom_call.1} parent=1 // pred_check_branch
      %86 = sbr.rel (0) target = $region53
    $region52: #{tpu_custom_call.1} parent=1 // pred_region
      %87 = dma.done [#allocation16], 512
    $region53: #{tpu_custom_call.1} parent=1 // pred_fallthru
      _
    %v88 = vld [vmem:[#allocation9] sm:$0xff]
    %v89 = vld [vmem:[#allocation9 + $0x8] sm:$0xff]
    %v90 = vld [vmem:[#allocation9 + $0x10] sm:$0xff]
    %v91 = vld [vmem:[#allocation9 + $0x18] sm:$0xff]
    %v92 = vld [vmem:[#allocation9 + $0x20] sm:$0xff]
    %v93 = vld [vmem:[#allocation9 + $0x28] sm:$0xff]
    %v94 = vld [vmem:[#allocation9 + $0x30] sm:$0xff]
    %v95 = vld [vmem:[#allocation9 + $0x38] sm:$0xff]
    %v96 = vld [vmem:[%s1] sm:$0xff]
    %v97 = vld [vmem:[%s1 + $0x8] sm:$0xff]
    %v98 = vld [vmem:[%s1 + $0x10] sm:$0xff]
    %v99 = vld [vmem:[%s1 + $0x18] sm:$0xff]
    %v100 = vld [vmem:[%s2] sm:$0x3]
    %v102 = vlaneseq
    %v103 = vshrl.u32 %v102, 7
    %v104 = vsub.s32 0, %v103
    %v105 = vrot.slane %v100, %v104
    %v106 = vlaneseq
    %v107 = vshrl.u32 %v106, 7
    %v108 = vsub.s32 1, %v107
    %v109 = vrot.slane %v100, %v108
    %vm112 = vcmask 130048
    %v114 = vsel %vm112, %v88, 0
    %v117 = vsel %vm112, %v89, 0
    %v120 = vsel %vm112, %v90, 0
    %v123 = vsel %vm112, %v91, 0
    %v126 = vsel %vm112, %v92, 0
    %v129 = vsel %vm112, %v93, 0
    %v132 = vsel %vm112, %v94, 0
    %v135 = vsel %vm112, %v95, 0
    %137 = vmatprep.subr.mxu0 %v97
    %138 = vmatpush1.msra.mxu0 %v96
    %139 = vmatprep.subr.mxu0 %v99
    %140 = vmatpush1.msra.mxu0 %v98
    %141 = vmatprep.subr.mxu0 0.0
    %142 = vmatpush1.msra.mxu0 0.0
    %143 = vmatprep.subr.mxu0 0.0
    %144 = vmatpush1.msra.mxu0 0.0
    %145 = vmatprep.subr.mxu0 0.0
    %146 = vmatpush1.msra.mxu0 0.0
    %147 = vmatprep.subr.mxu0 0.0
    %148 = vmatpush1.msra.mxu0 0.0
    %149 = vmatprep.subr.mxu0 0.0
    %150 = vmatpush1.msra.mxu0 0.0
    %151 = vmatprep.subr.mxu0 0.0
    %152 = vmatpush1.msra.mxu0 0.0
    %153 = vmatprep.subr.mxu0 0.0
    %154 = vmatpush1.msra.mxu0 0.0
    %155 = vmatprep.subr.mxu0 0.0
    %156 = vmatpush1.msra.mxu0 0.0
    %157 = vmatprep.subr.mxu0 0.0
    %158 = vmatpush1.msra.mxu0 0.0
    %159 = vmatprep.subr.mxu0 0.0
    %160 = vmatpush1.msra.mxu0 0.0
    %161 = vmatprep.subr.mxu0 0.0
    %162 = vmatpush1.msra.mxu0 0.0
    %163 = vmatprep.subr.mxu0 0.0
    %164 = vmatpush1.msra.mxu0 0.0
    %165 = vmatprep.subr.mxu0 0.0
    %166 = vmatpush1.msra.mxu0 0.0
    %167 = vmatprep.subr.mxu0 0.0
    %168 = vmatpush1.msra.mxu0 0.0
    %169 = vmatprep.subr.mxu0 0.0
    %170 = vmatpush1.msra.mxu0 0.0
    %171 = vmatprep.subr.mxu0 0.0
    %172 = vmatpush1.msra.mxu0 0.0
    %173 = vmatprep.subr.mxu0 0.0
    %174 = vmatpush1.msra.mxu0 0.0
    %175 = vmatprep.subr.mxu0 0.0
    %176 = vmatpush1.msra.mxu0 0.0
    %177 = vmatprep.subr.mxu0 0.0
    %178 = vmatpush1.msra.mxu0 0.0
    %179 = vmatprep.subr.mxu0 0.0
    %180 = vmatpush1.msra.mxu0 0.0
    %181 = vmatprep.subr.mxu0 0.0
    %182 = vmatpush1.msra.mxu0 0.0
    %183 = vmatprep.subr.mxu0 0.0
    %184 = vmatpush1.msra.mxu0 0.0
    %185 = vmatprep.subr.mxu0 0.0
    %186 = vmatpush1.msra.mxu0 0.0
    %187 = vmatprep.subr.mxu0 0.0
    %188 = vmatpush1.msra.mxu0 0.0
    %189 = vmatprep.subr.mxu0 0.0
    %190 = vmatpush1.msra.mxu0 0.0
    %191 = vmatprep.subr.mxu0 0.0
    %192 = vmatpush1.msra.mxu0 0.0
    %193 = vmatprep.subr.mxu0 0.0
    %194 = vmatpush1.msra.mxu0 0.0
    %195 = vmatprep.subr.mxu0 0.0
    %196 = vmatpush1.msra.mxu0 0.0
    %197 = vmatprep.subr.mxu0 0.0
    %198 = vmatpush1.msra.mxu0 0.0
    %199 = vmatprep.subr.mxu0 0.0
    %200 = vmatpush1.msra.mxu0 0.0
    %201 = vmatprep.mubr.f32.mxu0 0.0
    %202 = vmatmul.mubr.f32.gmra.mrb[0].mxu0 %v114
    %v203 = vpop.f32.mrb[0].mxu0
    %v204 = vadd.f32 %v105, %v203
    %v205 = vpop.f32.mrb[0].mxu0
    %v206 = vadd.f32 %v109, %v205
    %207 = vmatprep.mubr.f32.mxu0 0.0
    %208 = vmatmul.mubr.f32.gmra.mrb[0].mxu0 %v117
    %v209 = vpop.f32.mrb[0].mxu0
    %v210 = vadd.f32 %v105, %v209
    %v211 = vpop.f32.mrb[0].mxu0
    %v212 = vadd.f32 %v109, %v211
    %213 = vmatprep.mubr.f32.mxu0 0.0
    %214 = vmatmul.mubr.f32.gmra.mrb[0].mxu0 %v120
    %v215 = vpop.f32.mrb[0].mxu0
    %v216 = vadd.f32 %v105, %v215
    %v217 = vpop.f32.mrb[0].mxu0
    %v218 = vadd.f32 %v109, %v217
    %219 = vmatprep.mubr.f32.mxu0 0.0
    %220 = vmatmul.mubr.f32.gmra.mrb[0].mxu0 %v123
    %v221 = vpop.f32.mrb[0].mxu0
    %v222 = vadd.f32 %v105, %v221
    %v223 = vpop.f32.mrb[0].mxu0
    %v224 = vadd.f32 %v109, %v223
    %225 = vmatprep.mubr.f32.mxu0 0.0
    %226 = vmatmul.mubr.f32.gmra.mrb[0].mxu0 %v126
    %v227 = vpop.f32.mrb[0].mxu0
    %v228 = vadd.f32 %v105, %v227
    %v229 = vpop.f32.mrb[0].mxu0
    %v230 = vadd.f32 %v109, %v229
    %231 = vmatprep.mubr.f32.mxu0 0.0
    %232 = vmatmul.mubr.f32.gmra.mrb[0].mxu0 %v129
    %v233 = vpop.f32.mrb[0].mxu0
    %v234 = vadd.f32 %v105, %v233
    %v235 = vpop.f32.mrb[0].mxu0
    %v236 = vadd.f32 %v109, %v235
    %237 = vmatprep.mubr.f32.mxu0 0.0
    %238 = vmatmul.mubr.f32.gmra.mrb[0].mxu0 %v132
    %v239 = vpop.f32.mrb[0].mxu0
    %v240 = vadd.f32 %v105, %v239
    %v241 = vpop.f32.mrb[0].mxu0
    %v242 = vadd.f32 %v109, %v241
    %243 = vmatprep.mubr.f32.mxu0 0.0
    %244 = vmatmul.mubr.f32.gmra.mrb[0].mxu0 %v135
    %v245 = vpop.f32.mrb[0].mxu0
    %v246 = vadd.f32 %v105, %v245
    %v247 = vpop.f32.mrb[0].mxu0
    %v248 = vadd.f32 %v109, %v247
    %249 = vdwg.mxu0
    %250 = vst [vmem:[#allocation2] sm:$0xff] %v204
    %251 = vst [vmem:[#allocation2 + $0x8] sm:$0xff] %v210
    %252 = vst [vmem:[#allocation2 + $0x10] sm:$0xff] %v216
    %253 = vst [vmem:[#allocation2 + $0x18] sm:$0xff] %v222
    %254 = vst [vmem:[#allocation2 + $0x20] sm:$0xff] %v228
    %255 = vst [vmem:[#allocation2 + $0x28] sm:$0xff] %v234
    %256 = vst [vmem:[#allocation2 + $0x30] sm:$0xff] %v240
    %257 = vst [vmem:[#allocation2 + $0x38] sm:$0xff] %v246
    %258 = vst [vmem:[#allocation3] sm:$0xff] %v206
    %259 = vst [vmem:[#allocation3 + $0x8] sm:$0xff] %v212
    %260 = vst [vmem:[#allocation3 + $0x10] sm:$0xff] %v218
    %261 = vst [vmem:[#allocation3 + $0x18] sm:$0xff] %v224
    %262 = vst [vmem:[#allocation3 + $0x20] sm:$0xff] %v230
    %263 = vst [vmem:[#allocation3 + $0x28] sm:$0xff] %v236
    %264 = vst [vmem:[#allocation3 + $0x30] sm:$0xff] %v242
    %265 = vst [vmem:[#allocation3 + $0x38] sm:$0xff] %v248
    %vm266 = vcmask 523264
    %267 = vst.msk [vmem:[#allocation6] sm:$0xff] %vm266, 0.0
    %vm268 = vcmask 261120
    %269 = vst.msk [vmem:[#allocation7] sm:$0xff] %vm268, 0.0
    %270 = vst.msk [vmem:[#allocation8] sm:$0xff] %vm268, 0.0
    loop: start=0, step=1, limit=8
    $region54: #{tpu_custom_call.1} parent=1 // loop_pre_header
      _
    $region55: #{tpu_custom_call.1} parent=1 // loop_header
      %s272 = sphi 0, %s276
      %p273 = scmp.ge.s32.totalorder %s272, 8
    $region56: #{tpu_custom_call.1} parent=1 // loop_header_branch
      %275 = sbr.rel (%p273) target = $region60
    $region57: #{tpu_custom_call.1} parent=1 // loop_body
      %s277 = ssub.s32 7, %s272
      %v278 = vld [vmem:[#allocation6] sm:$0xff]
      %v279 = vld [vmem:[#allocation12] sm:$0xff]
      %v280 = vld [vmem:[#allocation12 + $0x8] sm:$0xff]
      %v281 = vld [vmem:[#allocation12 + $0x10] sm:$0xff]
      %v282 = vld [vmem:[#allocation12 + $0x18] sm:$0xff]
      %v283 = vld [vmem:[#allocation12 + $0x20] sm:$0xff]
      %v284 = vld [vmem:[#allocation12 + $0x28] sm:$0xff]
      %v285 = vld [vmem:[#allocation12 + $0x30] sm:$0xff]
      %v286 = vld [vmem:[#allocation12 + $0x38] sm:$0xff]
      %v287 = vld [vmem:[#allocation12 + $0x40] sm:$0xff]
      %v288 = vld [vmem:[#allocation12 + $0x48] sm:$0xff]
      %v289 = vld [vmem:[#allocation12 + $0x50] sm:$0xff]
      %v290 = vld [vmem:[#allocation12 + $0x58] sm:$0xff]
      %v291 = vld [vmem:[#allocation12 + $0x60] sm:$0xff]
      %v292 = vld [vmem:[#allocation12 + $0x68] sm:$0xff]
      %v293 = vld [vmem:[#allocation12 + $0x70] sm:$0xff]
      %v294 = vld [vmem:[#allocation12 + $0x78] sm:$0xff]
      %v296 = vsel %vm266, %v278, 0
      %298 = vmatprep.subr.mxu0 %v280
      %299 = vmatpush1.msra.mxu0 %v279
      %300 = vmatprep.subr.mxu0 %v282
      %301 = vmatpush1.msra.mxu0 %v281
      %302 = vmatprep.subr.mxu0 %v284
      %303 = vmatpush1.msra.mxu0 %v283
      %304 = vmatprep.subr.mxu0 %v286
      %305 = vmatpush1.msra.mxu0 %v285
      %306 = vmatprep.subr.mxu0 %v288
      %307 = vmatpush1.msra.mxu0 %v287
      %308 = vmatprep.subr.mxu0 %v290
      %309 = vmatpush1.msra.mxu0 %v289
      %310 = vmatprep.subr.mxu0 %v292
      %311 = vmatpush1.msra.mxu0 %v291
      %312 = vmatprep.subr.mxu0 %v294
      %313 = vmatpush1.msra.mxu0 %v293
      %314 = vmatprep.subr.mxu0 0.0
      %315 = vmatpush1.msra.mxu0 0.0
      %316 = vmatprep.subr.mxu0 0.0
      %317 = vmatpush1.msra.mxu0 0.0
      %318 = vmatprep.subr.mxu0 0.0
      %319 = vmatpush1.msra.mxu0 0.0
      %320 = vmatprep.subr.mxu0 0.0
      %321 = vmatpush1.msra.mxu0 0.0
      %322 = vmatprep.subr.mxu0 0.0
      %323 = vmatpush1.msra.mxu0 0.0
      %324 = vmatprep.subr.mxu0 0.0
      %325 = vmatpush1.msra.mxu0 0.0
      %326 = vmatprep.subr.mxu0 0.0
      %327 = vmatpush1.msra.mxu0 0.0
      %328 = vmatprep.subr.mxu0 0.0
      %329 = vmatpush1.msra.mxu0 0.0
      %330 = vmatprep.subr.mxu0 0.0
      %331 = vmatpush1.msra.mxu0 0.0
      %332 = vmatprep.subr.mxu0 0.0
      %333 = vmatpush1.msra.mxu0 0.0
      %334 = vmatprep.subr.mxu0 0.0
      %335 = vmatpush1.msra.mxu0 0.0
      %336 = vmatprep.subr.mxu0 0.0
      %337 = vmatpush1.msra.mxu0 0.0
      %338 = vmatprep.subr.mxu0 0.0
      %339 = vmatpush1.msra.mxu0 0.0
      %340 = vmatprep.subr.mxu0 0.0
      %341 = vmatpush1.msra.mxu0 0.0
      %342 = vmatprep.subr.mxu0 0.0
      %343 = vmatpush1.msra.mxu0 0.0
      %344 = vmatprep.subr.mxu0 0.0
      %345 = vmatpush1.msra.mxu0 0.0
      %346 = vmatprep.subr.mxu0 0.0
      %347 = vmatpush1.msra.mxu0 0.0
      %348 = vmatprep.subr.mxu0 0.0
      %349 = vmatpush1.msra.mxu0 0.0
      %350 = vmatprep.subr.mxu0 0.0
      %351 = vmatpush1.msra.mxu0 0.0
      %352 = vmatprep.subr.mxu0 0.0
      %353 = vmatpush1.msra.mxu0 0.0
      %354 = vmatprep.subr.mxu0 0.0
      %355 = vmatpush1.msra.mxu0 0.0
      %356 = vmatprep.subr.mxu0 0.0
      %357 = vmatpush1.msra.mxu0 0.0
      %358 = vmatprep.subr.mxu0 0.0
      %359 = vmatpush1.msra.mxu0 0.0
      %360 = vmatprep.subr.mxu0 0.0
      %361 = vmatpush1.msra.mxu0 0.0
      %362 = vmatprep.mubr.f32.mxu0 0.0
      %363 = vmatmul.mubr.f32.gmra.mrb[0].mxu0 %v296
      %v364 = vpop.f32.mrb[0].mxu0
      %v365 = vadd.f32 0.0, %v364
      %v366 = vpop.f32.mrb[0].mxu0
      %v367 = vadd.f32 0.0, %v366
      %368 = vdwg.mxu0
      %s369 = smul.u32 %s272, 8
      %s370 = scalar_lea.vmem [#allocation2], %s369
      %v371 = vld [vmem:[%s370] sm:$0xff]
      %v372 = vadd.f32 %v371, %v365
      %s373 = smul.u32 %s277, 8
      %s374 = scalar_lea.vmem [#allocation3], %s373
      %v375 = vld [vmem:[%s374] sm:$0xff]
      %v376 = vadd.f32 %v375, %v367
      %v377 = vxor.u32 %v372, 2147483648
      %v378 = vmul.f32 %v377, 1.442695
      %v379 = vpow.pop %v378
      %v380 = vadd.f32 %v379, 1.0
      %v381 = vrcp.pop %v380
      %v382 = vmul.f32 1.0, %v381
      %v383 = vtanh.pop %v372
      %v384 = vxor.u32 %v376, 2147483648
      %v385 = vmul.f32 %v384, 1.442695
      %v386 = vpow.pop %v385
      %v387 = vadd.f32 %v386, 1.0
      %v388 = vrcp.pop %v387
      %v389 = vmul.f32 1.0, %v388
      %v390 = vtanh.pop %v376
      %v391 = vld [vmem:[#allocation7] sm:$0xff]
      %393 = vrot.lane.b32.xlu0 %v391, 32
      %v394 = vpop.permute.xlu0 %393
      %v396 = vmul.f32 %v382, %v394
      %398 = vrot.lane.b32.xlu0 %v383, 64
      %v399 = vpop.permute.xlu0 %398
      %v401 = vmul.f32 %v382, %v399
      %403 = vrot.lane.b32.xlu0 %v401, 32
      %v404 = vpop.permute.xlu0 %403
      %v406 = vadd.f32 %v396, %v404
      %v407 = vtanh.pop %v406
      %409 = vrot.lane.b32.xlu0 %v407, 64
      %v410 = vpop.permute.xlu0 %409
      %v412 = vmul.f32 %v382, %v410
      %v413 = vld [vmem:[#allocation8] sm:$0xff]
      %415 = vrot.lane.b32.xlu0 %v413, 32
      %v416 = vpop.permute.xlu0 %415
      %v418 = vmul.f32 %v389, %v416
      %420 = vrot.lane.b32.xlu0 %v390, 64
      %v421 = vpop.permute.xlu0 %420
      %v423 = vmul.f32 %v389, %v421
      %425 = vrot.lane.b32.xlu0 %v423, 32
      %v426 = vpop.permute.xlu0 %425
      %v428 = vadd.f32 %v418, %v426
      %v429 = vtanh.pop %v428
      %431 = vrot.lane.b32.xlu0 %v429, 64
      %v432 = vpop.permute.xlu0 %431
      %v434 = vmul.f32 %v389, %v432
      %436 = vrot.lane.b32.xlu0 %v406, 96
      %v437 = vpop.permute.xlu0 %436
      %439 = vst.msk [vmem:[#allocation7] sm:$0xff] %vm268, %v437
      %441 = vrot.lane.b32.xlu0 %v428, 96
      %v442 = vpop.permute.xlu0 %441
      %444 = vst.msk [vmem:[#allocation8] sm:$0xff] %vm268, %v442
      %446 = vrot.lane.b32.xlu0 %v412, 32
      %v447 = vpop.permute.xlu0 %446
      %450 = vrot.lane.b32.xlu0 %v434, 64
      %v451 = vpop.permute.xlu0 %450
      %v453 = vsel %vm268, %v447, %v451
      %454 = vst.msk [vmem:[#allocation6] sm:$0xff] %vm266, %v453
      %s455 = scalar_lea.vmem [#allocation4], %s369
      %456 = vst.msk [vmem:[%s455] sm:$0xff] %vm268, %v447
      %457 = vrot.lane.b32.xlu0 %v434, 32
      %v458 = vpop.permute.xlu0 %457
      %s460 = scalar_lea.vmem [#allocation5], %s373
      %461 = vst.msk [vmem:[%s460] sm:$0xff] %vm268, %v458
    $region58: #{tpu_custom_call.1} parent=1 // loop_footer
      %s276 = sadd.s32 1, %s272
    $region59: #{tpu_custom_call.1} parent=1 // loop_footer_branch
      %271 = sbr.rel target = $region55
    $region60: #{tpu_custom_call.1} parent=1 // loop_exit
      _
    %v462 = vld [vmem:[#allocation4] sm:$0xff]
    %v463 = vld [vmem:[#allocation4 + $0x8] sm:$0xff]
    %v464 = vld [vmem:[#allocation4 + $0x10] sm:$0xff]
    %v465 = vld [vmem:[#allocation4 + $0x18] sm:$0xff]
    %v466 = vld [vmem:[#allocation4 + $0x20] sm:$0xff]
    %v467 = vld [vmem:[#allocation4 + $0x28] sm:$0xff]
    %v468 = vld [vmem:[#allocation4 + $0x30] sm:$0xff]
    %v469 = vld [vmem:[#allocation4 + $0x38] sm:$0xff]
    %v470 = vld [vmem:[#allocation5] sm:$0xff]
    %v471 = vld [vmem:[#allocation5 + $0x8] sm:$0xff]
    %v472 = vld [vmem:[#allocation5 + $0x10] sm:$0xff]
    %v473 = vld [vmem:[#allocation5 + $0x18] sm:$0xff]
    %v474 = vld [vmem:[#allocation5 + $0x20] sm:$0xff]
    %v475 = vld [vmem:[#allocation5 + $0x28] sm:$0xff]
    %v476 = vld [vmem:[#allocation5 + $0x30] sm:$0xff]
    %v477 = vld [vmem:[#allocation5 + $0x38] sm:$0xff]
    %v478 = vld [vmem:[#allocation14] sm:$0xff]
    %v479 = vld [vmem:[#allocation14 + $0x8] sm:$0xff]
    %v480 = vld [vmem:[#allocation14 + $0x10] sm:$0xff]
    %v481 = vld [vmem:[#allocation14 + $0x18] sm:$0xff]
    %v482 = vld [vmem:[#allocation15] sm:$0xff]
    %v483 = vld [vmem:[#allocation15 + $0x8] sm:$0xff]
    %v484 = vld [vmem:[#allocation15 + $0x10] sm:$0xff]
    %v485 = vld [vmem:[#allocation15 + $0x18] sm:$0xff]
    %v487 = vsel %vm268, %v470, 0
    %v490 = vsel %vm268, %v471, 0
    %v493 = vsel %vm268, %v472, 0
    %v496 = vsel %vm268, %v473, 0
    %v499 = vsel %vm268, %v474, 0
    %v502 = vsel %vm268, %v475, 0
    %v505 = vsel %vm268, %v476, 0
    %v508 = vsel %vm268, %v477, 0
    %510 = vmatprep.subr.mxu0 0.0
    %511 = vmatpush1.msra.mxu0 %v482
    %512 = vmatprep.subr.mxu0 0.0
    %513 = vmatpush1.msra.mxu0 %v483
    %514 = vmatprep.subr.mxu0 0.0
    %515 = vmatpush1.msra.mxu0 %v484
    %516 = vmatprep.subr.mxu0 0.0
    %517 = vmatpush1.msra.mxu0 %v485
    %518 = vmatprep.subr.mxu0 0.0
    %519 = vmatpush1.msra.mxu0 0.0
    %520 = vmatprep.subr.mxu0 0.0
    %521 = vmatpush1.msra.mxu0 0.0
    %522 = vmatprep.subr.mxu0 0.0
    %523 = vmatpush1.msra.mxu0 0.0
    %524 = vmatprep.subr.mxu0 0.0
    %525 = vmatpush1.msra.mxu0 0.0
    %526 = vmatprep.subr.mxu0 0.0
    %527 = vmatpush1.msra.mxu0 0.0
    %528 = vmatprep.subr.mxu0 0.0
    %529 = vmatpush1.msra.mxu0 0.0
    %530 = vmatprep.subr.mxu0 0.0
    %531 = vmatpush1.msra.mxu0 0.0
    %532 = vmatprep.subr.mxu0 0.0
    %533 = vmatpush1.msra.mxu0 0.0
    %534 = vmatprep.subr.mxu0 0.0
    %535 = vmatpush1.msra.mxu0 0.0
    %536 = vmatprep.subr.mxu0 0.0
    %537 = vmatpush1.msra.mxu0 0.0
    %538 = vmatprep.subr.mxu0 0.0
    %539 = vmatpush1.msra.mxu0 0.0
    %540 = vmatprep.subr.mxu0 0.0
    %541 = vmatpush1.msra.mxu0 0.0
    %542 = vmatprep.subr.mxu0 0.0
    %543 = vmatpush1.msra.mxu0 0.0
    %544 = vmatprep.subr.mxu0 0.0
    %545 = vmatpush1.msra.mxu0 0.0
    %546 = vmatprep.subr.mxu0 0.0
    %547 = vmatpush1.msra.mxu0 0.0
    %548 = vmatprep.subr.mxu0 0.0
    %549 = vmatpush1.msra.mxu0 0.0
    %550 = vmatprep.subr.mxu0 0.0
    %551 = vmatpush1.msra.mxu0 0.0
    %552 = vmatprep.subr.mxu0 0.0
    %553 = vmatpush1.msra.mxu0 0.0
    %554 = vmatprep.subr.mxu0 0.0
    %555 = vmatpush1.msra.mxu0 0.0
    %556 = vmatprep.subr.mxu0 0.0
    %557 = vmatpush1.msra.mxu0 0.0
    %558 = vmatprep.subr.mxu0 0.0
    %559 = vmatpush1.msra.mxu0 0.0
    %560 = vmatprep.subr.mxu0 0.0
    %561 = vmatpush1.msra.mxu0 0.0
    %562 = vmatprep.subr.mxu0 0.0
    %563 = vmatpush1.msra.mxu0 0.0
    %564 = vmatprep.subr.mxu0 0.0
    %565 = vmatpush1.msra.mxu0 0.0
    %566 = vmatprep.subr.mxu0 0.0
    %567 = vmatpush1.msra.mxu0 0.0
    %568 = vmatprep.subr.mxu0 0.0
    %569 = vmatpush1.msra.mxu0 0.0
    %570 = vmatprep.subr.mxu0 0.0
    %571 = vmatpush1.msra.mxu0 0.0
    %572 = vmatprep.subr.mxu0 0.0
    %573 = vmatpush1.msra.mxu0 0.0
    %574 = vmatprep.mubr.f32.mxu0 0.0
    %575 = vmatmul.mubr.f32.gmra.mrb[0].mxu0 %v487
    %v576 = vpop.f32.mrb[0].mxu0
    %v577 = vadd.f32 0.0, %v576
    %v578 = vpop.f32.mrb[0].mxu0
    %579 = vmatprep.mubr.f32.mxu0 0.0
    %580 = vmatmul.mubr.f32.gmra.mrb[0].mxu0 %v490
    %v581 = vpop.f32.mrb[0].mxu0
    %v582 = vadd.f32 0.0, %v581
    %v583 = vpop.f32.mrb[0].mxu0
    %584 = vmatprep.mubr.f32.mxu0 0.0
    %585 = vmatmul.mubr.f32.gmra.mrb[0].mxu0 %v493
    %v586 = vpop.f32.mrb[0].mxu0
    %v587 = vadd.f32 0.0, %v586
    %v588 = vpop.f32.mrb[0].mxu0
    %589 = vmatprep.mubr.f32.mxu0 0.0
    %590 = vmatmul.mubr.f32.gmra.mrb[0].mxu0 %v496
    %v591 = vpop.f32.mrb[0].mxu0
    %v592 = vadd.f32 0.0, %v591
    %v593 = vpop.f32.mrb[0].mxu0
    %594 = vmatprep.mubr.f32.mxu0 0.0
    %595 = vmatmul.mubr.f32.gmra.mrb[0].mxu0 %v499
    %v596 = vpop.f32.mrb[0].mxu0
    %v597 = vadd.f32 0.0, %v596
    %v598 = vpop.f32.mrb[0].mxu0
    %599 = vmatprep.mubr.f32.mxu0 0.0
    %600 = vmatmul.mubr.f32.gmra.mrb[0].mxu0 %v502
    %v601 = vpop.f32.mrb[0].mxu0
    %v602 = vadd.f32 0.0, %v601
    %v603 = vpop.f32.mrb[0].mxu0
    %604 = vmatprep.mubr.f32.mxu0 0.0
    %605 = vmatmul.mubr.f32.gmra.mrb[0].mxu0 %v505
    %v606 = vpop.f32.mrb[0].mxu0
    %v607 = vadd.f32 0.0, %v606
    %v608 = vpop.f32.mrb[0].mxu0
    %609 = vmatprep.mubr.f32.mxu0 0.0
    %610 = vmatmul.mubr.f32.gmra.mrb[0].mxu0 %v508
    %v611 = vpop.f32.mrb[0].mxu0
    %v612 = vadd.f32 0.0, %v611
    %v613 = vpop.f32.mrb[0].mxu0
    %614 = vdwg.mxu0
    %v616 = vsel %vm268, %v462, 0
    %v619 = vsel %vm268, %v463, 0
    %v622 = vsel %vm268, %v464, 0
    %v625 = vsel %vm268, %v465, 0
    %v628 = vsel %vm268, %v466, 0
    %v631 = vsel %vm268, %v467, 0
    %v634 = vsel %vm268, %v468, 0
    %v637 = vsel %vm268, %v469, 0
    %639 = vmatprep.subr.mxu0 0.0
    %640 = vmatpush1.msra.mxu0 %v478
    %641 = vmatprep.subr.mxu0 0.0
    %642 = vmatpush1.msra.mxu0 %v479
    %643 = vmatprep.subr.mxu0 0.0
    %644 = vmatpush1.msra.mxu0 %v480
    %645 = vmatprep.subr.mxu0 0.0
    %646 = vmatpush1.msra.mxu0 %v481
    %647 = vmatprep.subr.mxu0 0.0
    %648 = vmatpush1.msra.mxu0 0.0
    %649 = vmatprep.subr.mxu0 0.0
    %650 = vmatpush1.msra.mxu0 0.0
    %651 = vmatprep.subr.mxu0 0.0
    %652 = vmatpush1.msra.mxu0 0.0
    %653 = vmatprep.subr.mxu0 0.0
    %654 = vmatpush1.msra.mxu0 0.0
    %655 = vmatprep.subr.mxu0 0.0
    %656 = vmatpush1.msra.mxu0 0.0
    %657 = vmatprep.subr.mxu0 0.0
    %658 = vmatpush1.msra.mxu0 0.0
    %659 = vmatprep.subr.mxu0 0.0
    %660 = vmatpush1.msra.mxu0 0.0
    %661 = vmatprep.subr.mxu0 0.0
    %662 = vmatpush1.msra.mxu0 0.0
    %663 = vmatprep.subr.mxu0 0.0
    %664 = vmatpush1.msra.mxu0 0.0
    %665 = vmatprep.subr.mxu0 0.0
    %666 = vmatpush1.msra.mxu0 0.0
    %667 = vmatprep.subr.mxu0 0.0
    %668 = vmatpush1.msra.mxu0 0.0
    %669 = vmatprep.subr.mxu0 0.0
    %670 = vmatpush1.msra.mxu0 0.0
    %671 = vmatprep.subr.mxu0 0.0
    %672 = vmatpush1.msra.mxu0 0.0
    %673 = vmatprep.subr.mxu0 0.0
    %674 = vmatpush1.msra.mxu0 0.0
    %675 = vmatprep.subr.mxu0 0.0
    %676 = vmatpush1.msra.mxu0 0.0
    %677 = vmatprep.subr.mxu0 0.0
    %678 = vmatpush1.msra.mxu0 0.0
    %679 = vmatprep.subr.mxu0 0.0
    %680 = vmatpush1.msra.mxu0 0.0
    %681 = vmatprep.subr.mxu0 0.0
    %682 = vmatpush1.msra.mxu0 0.0
    %683 = vmatprep.subr.mxu0 0.0
    %684 = vmatpush1.msra.mxu0 0.0
    %685 = vmatprep.subr.mxu0 0.0
    %686 = vmatpush1.msra.mxu0 0.0
    %687 = vmatprep.subr.mxu0 0.0
    %688 = vmatpush1.msra.mxu0 0.0
    %689 = vmatprep.subr.mxu0 0.0
    %690 = vmatpush1.msra.mxu0 0.0
    %691 = vmatprep.subr.mxu0 0.0
    %692 = vmatpush1.msra.mxu0 0.0
    %693 = vmatprep.subr.mxu0 0.0
    %694 = vmatpush1.msra.mxu0 0.0
    %695 = vmatprep.subr.mxu0 0.0
    %696 = vmatpush1.msra.mxu0 0.0
    %697 = vmatprep.subr.mxu0 0.0
    %698 = vmatpush1.msra.mxu0 0.0
    %699 = vmatprep.subr.mxu0 0.0
    %700 = vmatpush1.msra.mxu0 0.0
    %701 = vmatprep.subr.mxu0 0.0
    %702 = vmatpush1.msra.mxu0 0.0
    %703 = vmatprep.mubr.f32.mxu0 0.0
    %704 = vmatmul.mubr.f32.gmra.mrb[0].mxu0 %v616
    %v705 = vpop.f32.mrb[0].mxu0
    %v706 = vadd.f32 %v577, %v705
    %v707 = vpop.f32.mrb[0].mxu0
    %708 = vmatprep.mubr.f32.mxu0 0.0
    %709 = vmatmul.mubr.f32.gmra.mrb[0].mxu0 %v619
    %v710 = vpop.f32.mrb[0].mxu0
    %v711 = vadd.f32 %v582, %v710
    %v712 = vpop.f32.mrb[0].mxu0
    %713 = vmatprep.mubr.f32.mxu0 0.0
    %714 = vmatmul.mubr.f32.gmra.mrb[0].mxu0 %v622
    %v715 = vpop.f32.mrb[0].mxu0
    %v716 = vadd.f32 %v587, %v715
    %v717 = vpop.f32.mrb[0].mxu0
    %718 = vmatprep.mubr.f32.mxu0 0.0
    %719 = vmatmul.mubr.f32.gmra.mrb[0].mxu0 %v625
    %v720 = vpop.f32.mrb[0].mxu0
    %v721 = vadd.f32 %v592, %v720
    %v722 = vpop.f32.mrb[0].mxu0
    %723 = vmatprep.mubr.f32.mxu0 0.0
    %724 = vmatmul.mubr.f32.gmra.mrb[0].mxu0 %v628
    %v725 = vpop.f32.mrb[0].mxu0
    %v726 = vadd.f32 %v597, %v725
    %v727 = vpop.f32.mrb[0].mxu0
    %728 = vmatprep.mubr.f32.mxu0 0.0
    %729 = vmatmul.mubr.f32.gmra.mrb[0].mxu0 %v631
    %v730 = vpop.f32.mrb[0].mxu0
    %v731 = vadd.f32 %v602, %v730
    %v732 = vpop.f32.mrb[0].mxu0
    %733 = vmatprep.mubr.f32.mxu0 0.0
    %734 = vmatmul.mubr.f32.gmra.mrb[0].mxu0 %v634
    %v735 = vpop.f32.mrb[0].mxu0
    %v736 = vadd.f32 %v607, %v735
    %v737 = vpop.f32.mrb[0].mxu0
    %738 = vmatprep.mubr.f32.mxu0 0.0
    %739 = vmatmul.mubr.f32.gmra.mrb[0].mxu0 %v637
    %v740 = vpop.f32.mrb[0].mxu0
    %v741 = vadd.f32 %v612, %v740
    %v742 = vpop.f32.mrb[0].mxu0
    %743 = vdwg.mxu0
    %v744 = vld [vmem:[%s6] sm:$0x1]
    %v746 = vlaneseq
    %v747 = vshrl.u32 %v746, 7
    %v748 = vsub.s32 0, %v747
    %v749 = vrot.slane %v744, %v748
    %v751 = vadd.f32 %v706, %v749
    %v752 = vadd.f32 %v711, %v749
    %v753 = vadd.f32 %v716, %v749
    %v754 = vadd.f32 %v721, %v749
    %v755 = vadd.f32 %v726, %v749
    %v756 = vadd.f32 %v731, %v749
    %v757 = vadd.f32 %v736, %v749
    %v758 = vadd.f32 %v741, %v749
    %v759 = vtanh.pop %v751
    %v760 = vtanh.pop %v752
    %v761 = vtanh.pop %v753
    %v762 = vtanh.pop %v754
    %v763 = vtanh.pop %v755
    %v764 = vtanh.pop %v756
    %v765 = vtanh.pop %v757
    %v766 = vtanh.pop %v758
    %v767 = vld [vmem:[%s7] sm:$0xff]
    %v768 = vld [vmem:[%s7 + $0x8] sm:$0xff]
    %v769 = vld [vmem:[%s7 + $0x10] sm:$0xff]
    %v770 = vld [vmem:[%s7 + $0x18] sm:$0xff]
    %v771 = vld [vmem:[%s8] sm:$0x1]
    %v773 = vlaneseq
    %v774 = vshrl.u32 %v773, 7
    %v775 = vsub.s32 0, %v774
    %v776 = vrot.slane %v771, %v775
    %v779 = vsel %vm268, %v759, 0
    %v782 = vsel %vm268, %v760, 0
    %v785 = vsel %vm268, %v761, 0
    %v788 = vsel %vm268, %v762, 0
    %v791 = vsel %vm268, %v763, 0
    %v794 = vsel %vm268, %v764, 0
    %v797 = vsel %vm268, %v765, 0
    %v800 = vsel %vm268, %v766, 0
    %802 = vmatprep.subr.mxu0 0.0
    %803 = vmatpush1.msra.mxu0 %v767
    %804 = vmatprep.subr.mxu0 0.0
    %805 = vmatpush1.msra.mxu0 %v768
    %806 = vmatprep.subr.mxu0 0.0
    %807 = vmatpush1.msra.mxu0 %v769
    %808 = vmatprep.subr.mxu0 0.0
    %809 = vmatpush1.msra.mxu0 %v770
    %810 = vmatprep.subr.mxu0 0.0
    %811 = vmatpush1.msra.mxu0 0.0
    %812 = vmatprep.subr.mxu0 0.0
    %813 = vmatpush1.msra.mxu0 0.0
    %814 = vmatprep.subr.mxu0 0.0
    %815 = vmatpush1.msra.mxu0 0.0
    %816 = vmatprep.subr.mxu0 0.0
    %817 = vmatpush1.msra.mxu0 0.0
    %818 = vmatprep.subr.mxu0 0.0
    %819 = vmatpush1.msra.mxu0 0.0
    %820 = vmatprep.subr.mxu0 0.0
    %821 = vmatpush1.msra.mxu0 0.0
    %822 = vmatprep.subr.mxu0 0.0
    %823 = vmatpush1.msra.mxu0 0.0
    %824 = vmatprep.subr.mxu0 0.0
    %825 = vmatpush1.msra.mxu0 0.0
    %826 = vmatprep.subr.mxu0 0.0
    %827 = vmatpush1.msra.mxu0 0.0
    %828 = vmatprep.subr.mxu0 0.0
    %829 = vmatpush1.msra.mxu0 0.0
    %830 = vmatprep.subr.mxu0 0.0
    %831 = vmatpush1.msra.mxu0 0.0
    %832 = vmatprep.subr.mxu0 0.0
    %833 = vmatpush1.msra.mxu0 0.0
    %834 = vmatprep.subr.mxu0 0.0
    %835 = vmatpush1.msra.mxu0 0.0
    %836 = vmatprep.subr.mxu0 0.0
    %837 = vmatpush1.msra.mxu0 0.0
    %838 = vmatprep.subr.mxu0 0.0
    %839 = vmatpush1.msra.mxu0 0.0
    %840 = vmatprep.subr.mxu0 0.0
    %841 = vmatpush1.msra.mxu0 0.0
    %842 = vmatprep.subr.mxu0 0.0
    %843 = vmatpush1.msra.mxu0 0.0
    %844 = vmatprep.subr.mxu0 0.0
    %845 = vmatpush1.msra.mxu0 0.0
    %846 = vmatprep.subr.mxu0 0.0
    %847 = vmatpush1.msra.mxu0 0.0
    %848 = vmatprep.subr.mxu0 0.0
    %849 = vmatpush1.msra.mxu0 0.0
    %850 = vmatprep.subr.mxu0 0.0
    %851 = vmatpush1.msra.mxu0 0.0
    %852 = vmatprep.subr.mxu0 0.0
    %853 = vmatpush1.msra.mxu0 0.0
    %854 = vmatprep.subr.mxu0 0.0
    %855 = vmatpush1.msra.mxu0 0.0
    %856 = vmatprep.subr.mxu0 0.0
    %857 = vmatpush1.msra.mxu0 0.0
    %858 = vmatprep.subr.mxu0 0.0
    %859 = vmatpush1.msra.mxu0 0.0
    %860 = vmatprep.subr.mxu0 0.0
    %861 = vmatpush1.msra.mxu0 0.0
    %862 = vmatprep.subr.mxu0 0.0
    %863 = vmatpush1.msra.mxu0 0.0
    %864 = vmatprep.subr.mxu0 0.0
    %865 = vmatpush1.msra.mxu0 0.0
    %866 = vmatprep.mubr.f32.mxu0 0.0
    %867 = vmatmul.mubr.f32.gmra.mrb[0].mxu0 %v779
    %v868 = vpop.f32.mrb[0].mxu0
    %v869 = vadd.f32 %v776, %v868
    %v870 = vpop.f32.mrb[0].mxu0
    %871 = vmatprep.mubr.f32.mxu0 0.0
    %872 = vmatmul.mubr.f32.gmra.mrb[0].mxu0 %v782
    %v873 = vpop.f32.mrb[0].mxu0
    %v874 = vadd.f32 %v776, %v873
    %v875 = vpop.f32.mrb[0].mxu0
    %876 = vmatprep.mubr.f32.mxu0 0.0
    %877 = vmatmul.mubr.f32.gmra.mrb[0].mxu0 %v785
    %v878 = vpop.f32.mrb[0].mxu0
    %v879 = vadd.f32 %v776, %v878
    %v880 = vpop.f32.mrb[0].mxu0
    %881 = vmatprep.mubr.f32.mxu0 0.0
    %882 = vmatmul.mubr.f32.gmra.mrb[0].mxu0 %v788
    %v883 = vpop.f32.mrb[0].mxu0
    %v884 = vadd.f32 %v776, %v883
    %v885 = vpop.f32.mrb[0].mxu0
    %886 = vmatprep.mubr.f32.mxu0 0.0
    %887 = vmatmul.mubr.f32.gmra.mrb[0].mxu0 %v791
    %v888 = vpop.f32.mrb[0].mxu0
    %v889 = vadd.f32 %v776, %v888
    %v890 = vpop.f32.mrb[0].mxu0
    %891 = vmatprep.mubr.f32.mxu0 0.0
    %892 = vmatmul.mubr.f32.gmra.mrb[0].mxu0 %v794
    %v893 = vpop.f32.mrb[0].mxu0
    %v894 = vadd.f32 %v776, %v893
    %v895 = vpop.f32.mrb[0].mxu0
    %896 = vmatprep.mubr.f32.mxu0 0.0
    %897 = vmatmul.mubr.f32.gmra.mrb[0].mxu0 %v797
    %v898 = vpop.f32.mrb[0].mxu0
    %v899 = vadd.f32 %v776, %v898
    %v900 = vpop.f32.mrb[0].mxu0
    %901 = vmatprep.mubr.f32.mxu0 0.0
    %902 = vmatmul.mubr.f32.gmra.mrb[0].mxu0 %v800
    %v903 = vpop.f32.mrb[0].mxu0
    %v904 = vadd.f32 %v776, %v903
    %v905 = vpop.f32.mrb[0].mxu0
    %906 = vdwg.mxu0
    %vm907 = vcmask 64512
    %908 = vst.msk [vmem:[#allocation17] sm:$0xff] %vm907, %v869
    %909 = vst.msk [vmem:[#allocation17 + $0x8] sm:$0xff] %vm907, %v874
    %910 = vst.msk [vmem:[#allocation17 + $0x10] sm:$0xff] %vm907, %v879
    %911 = vst.msk [vmem:[#allocation17 + $0x18] sm:$0xff] %vm907, %v884
    %912 = vst.msk [vmem:[#allocation17 + $0x20] sm:$0xff] %vm907, %v889
    %913 = vst.msk [vmem:[#allocation17 + $0x28] sm:$0xff] %vm907, %v894
    %914 = vst.msk [vmem:[#allocation17 + $0x30] sm:$0xff] %vm907, %v899
    %915 = vst.msk [vmem:[#allocation17 + $0x38] sm:$0xff] %vm907, %v904
    // Predicated region
    $region61: #{tpu_custom_call.1} parent=1 // pred_check
      _
    $region62: #{tpu_custom_call.1} parent=1 // pred_check_branch
      %917 = sbr.rel (0) target = $region64
    $region63: #{tpu_custom_call.1} parent=1 // pred_region
      %s919 = ssub.s32 1024, 1024
      %920 = vsyncadd [#allocation11], %s919
      %s921 = sshll.u32 [#allocation17], 4
      %s922 = int_to_ptr.vmem [resolvable:$true] %s921
      %927 = dma.vmem_to_hbm [thread:$0]  %s922, 1024, %s9, [#allocation11], 128, 128, 8
    $region64: #{tpu_custom_call.1} parent=1 // pred_fallthru
      _
    // Predicated region
    $region65: #{tpu_custom_call.1} parent=1 // pred_check
      _
    $region66: #{tpu_custom_call.1} parent=1 // pred_check_branch
      %929 = sbr.rel (0) target = $region68
    $region67: #{tpu_custom_call.1} parent=1 // pred_region
      %930 = dma.done [#allocation11], 1024
    $region68: #{tpu_custom_call.1} parent=1 // pred_fallthru
      _
    %931 = vsyncpa [#allocation10], 1
    %932 = vsyncpa [#allocation13], 1
    %933 = vsyncpa [#allocation16], 1
    %934 = vsyncpa [#allocation11], 1

</llo_original>
